<compile_context>
chip_gen: v7x
topology: tpu7x:2x2x1
jax: 0.10.0
libtpu: 0.0.40
codegen_flags: <defaults>
</compile_context>

<pallas_src>
import jax
import jax.numpy as jnp
from jax.experimental import pallas as pl
from jax.experimental.pallas import tpu as pltpu

LANE = 128
SUBLANES = 8


def _loss_ref(score, label):
    """Plain-jnp reference / small-input fallback (matches the torch formula)."""
    s = score.astype(jnp.float32)
    l = label.astype(jnp.float32)
    return jnp.mean(jnp.log(1.0 + jnp.exp(-s * l)))


def _make_partial_kernel(tile_m, chunk_rows, m_valid, need_mask, compute_dtype):
    """Build the per-block partial-sum kernel (all shape params are static)."""
    n_chunks = tile_m // chunk_rows
    fold = chunk_rows // SUBLANES

    def kernel(score_ref, label_ref, partial_ref):
        base_row = pl.program_id(0) * tile_m

        def chunk_sum(c):
            r0 = pl.multiple_of(c * chunk_rows, chunk_rows)
            s = score_ref[pl.ds(r0, chunk_rows), :].astype(compute_dtype)
            l = label_ref[pl.ds(r0, chunk_rows), :].astype(compute_dtype)
            ys = -s * l
            if need_mask:
                # Mask rows past the valid row count of the ragged last grid
                # block.  Applied BEFORE exp so uninitialized edge data can
                # never produce inf/NaN: exp(-1e4) == 0 exactly -> log(1) == 0.
                rows = (jax.lax.broadcasted_iota(jnp.int32, (chunk_rows, LANE), 0)
                        + (base_row + r0))
                ys = jnp.where(rows < m_valid, ys, -1e4)
            # Same formula as torch: log(1 + exp(ys)).  (2 EUP ops / element.)
            sp = jnp.log(1.0 + jnp.exp(ys)).astype(jnp.float32)
            # Fold (chunk_rows, 128) -> (fold, 8, 128) and sum the leading axis:
            # tile-aligned regroup + pure VPU adds, result stays in vregs.
            return jnp.sum(sp.reshape(fold, SUBLANES, LANE), axis=0)

        acc = jax.lax.fori_loop(
            0, n_chunks,
            lambda c, a: a + chunk_sum(c),
            jnp.zeros((SUBLANES, LANE), jnp.float32),
            unroll=True,
        )
        partial_ref[...] = acc  # one unmasked lane-dense (8,128) store per step

    return kernel


def my_lossfun(score, label, *, tile_m_rows=1024, small_n_fallback=32768,
               transcendental_dtype=jnp.float32):
    """Pallas TPU version of My_lossfun.forward: mean(log(1 + exp(-score*label))).

    transcendental_dtype: set to jnp.bfloat16 on v6e/v7x for ~2x EUP throughput
    at ~1e-3 relative accuracy (keep f32 on v5e).  Accumulation is always f32.
    """
    assert score.shape == label.shape, (score.shape, label.shape)
    n_elem = int(score.size)

    if n_elem == 0:
        return jnp.float32(jnp.nan)  # torch .mean() of an empty tensor -> nan
    if n_elem < max(small_n_fallback, LANE):
        # Tiny inputs: pallas_call fixed overhead dominates; plain XLA wins.
        return _loss_ref(score, label)

    s_flat = score.reshape(-1)   # contiguous row-major reshape: no copy
    l_flat = label.reshape(-1)

    rem = n_elem % LANE
    main_len = n_elem - rem
    m_rows = main_len // LANE

    tail_sum = jnp.float32(0.0)
    if rem:
        # Sub-128 tail handled with a tiny plain-jnp expression.  The prefix
        # slice below is the one remaining copy and only happens when
        # n % 128 != 0 (the 2-D lane view needs 128-aligned length).
        ts = s_flat[main_len:].astype(jnp.float32)
        tl = l_flat[main_len:].astype(jnp.float32)
        tail_sum = jnp.sum(jnp.log(1.0 + jnp.exp(-ts * tl)))
        s_flat = s_flat[:main_len]
        l_flat = l_flat[:main_len]

    score2d = s_flat.reshape(m_rows, LANE)   # no copy
    label2d = l_flat.reshape(m_rows, LANE)

    # Tile selection: largest power of two <= tile_m_rows, halved until the
    # grid has >= 4 blocks so both v7x TensorCores get work (free on v5e/v6e).
    tile_m = 1 << max(3, int(tile_m_rows).bit_length() - 1)
    while tile_m > SUBLANES and pl.cdiv(m_rows, tile_m) < 4:
        tile_m //= 2
    num_blocks = pl.cdiv(m_rows, tile_m)
    need_mask = (m_rows % tile_m) != 0
    chunk_rows = min(64, tile_m)             # power of two, divides tile_m

    kernel = _make_partial_kernel(tile_m, chunk_rows, m_rows, need_mask,
                                  transcendental_dtype)

    in_bytes = main_len * (score.dtype.itemsize + label.dtype.itemsize)
    out_bytes = num_blocks * SUBLANES * LANE * 4
    cost = pl.CostEstimate(flops=4 * main_len,
                           transcendentals=2 * main_len,
                           bytes_accessed=in_bytes + out_bytes)

    partials = pl.pallas_call(
        kernel,
        out_shape=jax.ShapeDtypeStruct((num_blocks * SUBLANES, LANE), jnp.float32),
        grid_spec=pl.GridSpec(
            grid=(num_blocks,),
            in_specs=[
                pl.BlockSpec((tile_m, LANE), lambda i: (i, 0)),
                pl.BlockSpec((tile_m, LANE), lambda i: (i, 0)),
            ],
            out_specs=pl.BlockSpec((SUBLANES, LANE), lambda i: (i, 0)),
        ),
        compiler_params=pltpu.CompilerParams(
            # No carried state -> embarrassingly parallel grid axis.
            dimension_semantics=("parallel",),
        ),
        cost_estimate=cost,
    )(score2d, label2d)

    # Tiny second-stage reduction + mean over the real (unpadded) element count.
    return (jnp.sum(partials) + tail_sum) / jnp.float32(n_elem)


if __name__ == "__main__":
    key = jax.random.PRNGKey(0)
    ks = jax.random.split(key, 6)

    def make(kx, kl, shape):
        s = jax.random.normal(kx, shape, dtype=jnp.float32)
        l = jnp.where(jax.random.bernoulli(kl, 0.5, shape),
                      1.0, -1.0).astype(jnp.float32)
        return s, l

    # Case 1: tiny shape -> small-input fallback path.
    s1, l1 = make(ks[0], ks[1], (16, 128))
    out1 = jax.block_until_ready(my_lossfun(s1, l1))
    assert jnp.allclose(out1, _loss_ref(s1, l1), rtol=1e-4, atol=1e-6), (out1,)

    # Case 2: Pallas path, n % 128 == 0 (copy-free), ragged row count
    # (M = 750 rows, tile_m = 128 -> masked last block).
    s2, l2 = make(ks[2], ks[3], (250, 384))
    out2 = jax.block_until_ready(my_lossfun(s2, l2))
    assert jnp.allclose(out2, _loss_ref(s2, l2), rtol=1e-4, atol=1e-6), (out2,)

    # Case 3: Pallas path with a sub-128 tail (n = 50000, rem = 80) and a
    # ragged last grid block.
    s3, l3 = make(ks[4], ks[5], (250, 200))
    out3 = jax.block_until_ready(my_lossfun(s3, l3))
    assert jnp.allclose(out3, _loss_ref(s3, l3), rtol=1e-4, atol=1e-6), (out3,)

    print("KERNEL_OK")
</pallas_src>

<mosaic_0001>
module attributes {stable_mosaic.version = 11 : i64} {
  func.func @kernel(%arg0: i32, %arg1: memref<128x128xf32, #tpu.memory_space<vmem>>, %arg2: memref<128x128xf32, #tpu.memory_space<vmem>>, %arg3: memref<8x128xf32, #tpu.memory_space<vmem>>) attributes {dimension_semantics = [#tpu.dimension_semantics<parallel>], iteration_bounds = array<i64: 6>, scalar_prefetch = 0 : i64, scratch_operands = 0 : i64, tpu.core_type = #tpu.core_type<tc>, window_params = [{transform_indices = @transform_0, window_bounds = array<i64: 128, 128>}, {transform_indices = @transform_1, window_bounds = array<i64: 128, 128>}, {transform_indices = @transform_2, window_bounds = array<i64: 8, 128>}]} {
    %c128_i32 = arith.constant 128 : i32
    %0 = arith.muli %arg0, %c128_i32 : i32
    %cst = arith.constant 0.000000e+00 : f32
    %1 = vector.broadcast %cst : f32 to vector<8x128xf32>
    %c0_i32 = arith.constant 0 : i32
    %c64_i32 = arith.constant 64 : i32
    %2 = arith.muli %c0_i32, %c64_i32 : i32
    %3 = tpu.assume_multiple %2, 64 : i32
    %4 = arith.index_cast %3 : i32 to index
    %c0 = arith.constant 0 : index
    %5 = vector.load %arg1[%4, %c0] : memref<128x128xf32, #tpu.memory_space<vmem>>, vector<64x128xf32>
    %6 = arith.index_cast %3 : i32 to index
    %c0_0 = arith.constant 0 : index
    %7 = vector.load %arg2[%6, %c0_0] : memref<128x128xf32, #tpu.memory_space<vmem>>, vector<64x128xf32>
    %cst_1 = arith.constant 0.000000e+00 : f32
    %8 = vector.broadcast %cst_1 : f32 to vector<64x128xf32>
    %9 = arith.subf %8, %5 : vector<64x128xf32>
    %10 = arith.mulf %9, %7 : vector<64x128xf32>
    %11 = tpu.iota {dimensions = array<i32: 0>} : vector<64x128xi32>
    %12 = arith.addi %0, %3 : i32
    %13 = vector.broadcast %12 : i32 to vector<64x128xi32>
    %14 = arith.addi %11, %13 : vector<64x128xi32>
    %c750_i32 = arith.constant 750 : i32
    %15 = vector.broadcast %c750_i32 : i32 to vector<64x128xi32>
    %16 = arith.cmpi slt, %14, %15 : vector<64x128xi32>
    %cst_2 = arith.constant -1.000000e+04 : f32
    %17 = vector.broadcast %cst_2 : f32 to vector<64x128xf32>
    %18 = arith.select %16, %10, %17 : vector<64x128xi1>, vector<64x128xf32>
    %19 = math.exp %18 : vector<64x128xf32>
    %cst_3 = arith.constant 1.000000e+00 : f32
    %20 = vector.broadcast %cst_3 : f32 to vector<64x128xf32>
    %21 = arith.addf %20, %19 : vector<64x128xf32>
    %22 = math.log %21 : vector<64x128xf32>
    %23 = vector.shape_cast %22 : vector<64x128xf32> to vector<8x8x128xf32>
    %cst_4 = arith.constant dense<0.000000e+00> : vector<8x128xf32>
    %24 = vector.multi_reduction <add>, %23, %cst_4 [0] : vector<8x8x128xf32> to vector<8x128xf32>
    %25 = arith.addf %1, %24 : vector<8x128xf32>
    %c1_i32 = arith.constant 1 : i32
    %c64_i32_5 = arith.constant 64 : i32
    %26 = arith.muli %c1_i32, %c64_i32_5 : i32
    %27 = tpu.assume_multiple %26, 64 : i32
    %28 = arith.index_cast %27 : i32 to index
    %c0_6 = arith.constant 0 : index
    %29 = vector.load %arg1[%28, %c0_6] : memref<128x128xf32, #tpu.memory_space<vmem>>, vector<64x128xf32>
    %30 = arith.index_cast %27 : i32 to index
    %c0_7 = arith.constant 0 : index
    %31 = vector.load %arg2[%30, %c0_7] : memref<128x128xf32, #tpu.memory_space<vmem>>, vector<64x128xf32>
    %cst_8 = arith.constant 0.000000e+00 : f32
    %32 = vector.broadcast %cst_8 : f32 to vector<64x128xf32>
    %33 = arith.subf %32, %29 : vector<64x128xf32>
    %34 = arith.mulf %33, %31 : vector<64x128xf32>
    %35 = tpu.iota {dimensions = array<i32: 0>} : vector<64x128xi32>
    %36 = arith.addi %0, %27 : i32
    %37 = vector.broadcast %36 : i32 to vector<64x128xi32>
    %38 = arith.addi %35, %37 : vector<64x128xi32>
    %c750_i32_9 = arith.constant 750 : i32
    %39 = vector.broadcast %c750_i32_9 : i32 to vector<64x128xi32>
    %40 = arith.cmpi slt, %38, %39 : vector<64x128xi32>
    %cst_10 = arith.constant -1.000000e+04 : f32
    %41 = vector.broadcast %cst_10 : f32 to vector<64x128xf32>
    %42 = arith.select %40, %34, %41 : vector<64x128xi1>, vector<64x128xf32>
    %43 = math.exp %42 : vector<64x128xf32>
    %cst_11 = arith.constant 1.000000e+00 : f32
    %44 = vector.broadcast %cst_11 : f32 to vector<64x128xf32>
    %45 = arith.addf %44, %43 : vector<64x128xf32>
    %46 = math.log %45 : vector<64x128xf32>
    %47 = vector.shape_cast %46 : vector<64x128xf32> to vector<8x8x128xf32>
    %cst_12 = arith.constant dense<0.000000e+00> : vector<8x128xf32>
    %48 = vector.multi_reduction <add>, %47, %cst_12 [0] : vector<8x8x128xf32> to vector<8x128xf32>
    %49 = arith.addf %25, %48 : vector<8x128xf32>
    %c2_i32 = arith.constant 2 : i32
    %c0_13 = arith.constant 0 : index
    %c0_14 = arith.constant 0 : index
    %50 = vector.load %arg3[%c0_13, %c0_14] : memref<8x128xf32, #tpu.memory_space<vmem>>, vector<8x128xf32>
    tpu.vector_store %arg3[%c0_13, %c0_14], %49 {strides = array<i32>} : memref<8x128xf32, #tpu.memory_space<vmem>>, vector<8x128xf32>,
    return
  }
  func.func @transform_0(%arg0: i32) -> (i32, i32) {
    %c0_i32 = arith.constant 0 : i32
    %c0_i32_0 = arith.constant 0 : i32
    return %arg0, %c0_i32 : i32, i32
  }
  func.func @transform_1(%arg0: i32) -> (i32, i32) {
    %c0_i32 = arith.constant 0 : i32
    %c0_i32_0 = arith.constant 0 : i32
    return %arg0, %c0_i32 : i32, i32
  }
  func.func @transform_2(%arg0: i32) -> (i32, i32) {
    %c0_i32 = arith.constant 0 : i32
    %c0_i32_0 = arith.constant 0 : i32
    return %arg0, %c0_i32 : i32, i32
  }
}

</mosaic_0001>

<llo_original>
// kernel: tpu_custom_call.1
$region0: #{tpu_custom_call.1}
  #allocation0 [shape = 'u32[]', space=smem, size = 0x4, offset = 0x4, fixed_abs, tag = 'smem constant byte address 0x4 - core index']
  #allocation1 [shape = 'u32[144,128]{1,0:T(1,128)}', space=vmem, size = 0x12000, scoped, tag = 'internal scratch']
  %s0 = inlined_call_operand.hbm [shape: f32[750,128], index: 0, kind: input, shape index: {}]
  %s1 = inlined_call_operand.hbm [shape: f32[750,128], index: 1, kind: input, shape index: {}]
  %s2 = inlined_call_operand.hbm [shape: f32[48,128], index: 2, kind: output, shape index: {}]
  %s3 = sld [smem:[#allocation0]]
  $region49: #{tpu_custom_call.1} parent=0
    _
  %s5 = ssub.s32 1, %s3
  %s6 = scalar_select 0, %s5, %s3
  $region1: #{tpu_custom_call.1} parent=0
    #allocation2 [shape = 'u8[131072]{0}', space=vmem, size = 0x20000, scoped, tag = 'input window, operand 0']
    #allocation3 [shape = 's32[2]{0}', space=sflag, size = 0x8, scoped, tag = 'scoped memory for tpu_custom_call.1']
    #allocation4 [shape = 's32[2]{0}', space=sflag, size = 0x8, scoped, tag = 'scoped memory for tpu_custom_call.1']
    #allocation5 [shape = 'u8[131072]{0}', space=vmem, size = 0x20000, scoped, tag = 'input window, operand 1']
    #allocation6 [shape = 's32[2]{0}', space=sflag, size = 0x8, scoped, tag = 'scoped memory for tpu_custom_call.1']
    #allocation7 [shape = 'u8[8192]{0}', space=vmem, size = 0x2000, scoped, tag = 'output window, operand 0']
    %7 = vsyncpa [#allocation3], 0
    %s8 = scalar_lea.sflag [#allocation3], 1
    %9 = vsyncpa %s8, 0
    %10 = vsyncpa [#allocation6], 0
    %s11 = scalar_lea.sflag [#allocation6], 1
    %12 = vsyncpa %s11, 0
    %13 = vsyncpa [#allocation4], 0
    %s14 = scalar_lea.sflag [#allocation4], 1
    %15 = vsyncpa %s14, 0
    loop: start=0, step=1, limit=8
    $region2: #{tpu_custom_call.1} parent=1 // loop_pre_header
      _
    $region3: #{tpu_custom_call.1} parent=1 // loop_header
      %s17 = sphi 0, %s21
      %p18 = scmp.ge.s32.totalorder %s17, 8
      %s27 = sphi 0, %s29
      %s30 = sphi 0, %s27
      %s31 = sphi 0, %s30
      %s47 = sphi 0, %s31
      %s53 = sphi 0, %s55
      %s56 = sphi 0, %s53
      %s57 = sphi 0, %s56
      %s73 = sphi 0, %s57
      %s79 = sphi 0, %s81
      %s82 = sphi 0, %s79
      %s83 = sphi 0, %s82
      %s99 = sphi 0, %s83
    $region4: #{tpu_custom_call.1} parent=1 // loop_header_branch
      %20 = sbr.rel (%p18) target = $region8
    $region5: #{tpu_custom_call.1} parent=1 // loop_body
      %s22 = ssub.s32 %s17, 1
      %s23 = ssub.s32 %s17, 2
      %s24 = sadd.s32 %s17, 1
      %s25 = ssub.s32 %s17, %s24
      %p26 = scmp.eq.s32.totalorder %s25, 0
      %s28 = sadd.s32 %s27, 1
      %s29 = scalar_select %p26, %s27, %s28
      %p32 = pneg %p26
      %p33 = scmp.eq.s32.totalorder %s17, 5
      %p34 = por %p32, %p33
      %p35 = scmp.ne.s32.totalorder %s27, %s30
      %p36 = scmp.eq.s32.totalorder %s17, 0
      %p37 = por %p35, %p36
      %p38 = scmp.ne.s32.totalorder %s27, %s30
      %p39 = scmp.eq.s32.totalorder %s22, 5
      %p40 = por %p38, %p39
      %p41 = scmp.ne.s32.totalorder %s30, %s31
      %p42 = scmp.eq.s32.totalorder %s22, 0
      %p43 = por %p41, %p42
      %p44 = scmp.ne.s32.totalorder %s30, %s31
      %p45 = scmp.eq.s32.totalorder %s23, 5
      %p46 = por %p44, %p45
      %p48 = scmp.ne.s32.totalorder %s31, %s47
      %p49 = scmp.eq.s32.totalorder %s23, 0
      %p50 = por %p48, %p49
      %s51 = ssub.s32 %s17, %s24
      %p52 = scmp.eq.s32.totalorder %s51, 0
      %s54 = sadd.s32 %s53, 1
      %s55 = scalar_select %p52, %s53, %s54
      %p58 = pneg %p52
      %p59 = scmp.eq.s32.totalorder %s17, 5
      %p60 = por %p58, %p59
      %p61 = scmp.ne.s32.totalorder %s53, %s56
      %p62 = scmp.eq.s32.totalorder %s17, 0
      %p63 = por %p61, %p62
      %p64 = scmp.ne.s32.totalorder %s53, %s56
      %p65 = scmp.eq.s32.totalorder %s22, 5
      %p66 = por %p64, %p65
      %p67 = scmp.ne.s32.totalorder %s56, %s57
      %p68 = scmp.eq.s32.totalorder %s22, 0
      %p69 = por %p67, %p68
      %p70 = scmp.ne.s32.totalorder %s56, %s57
      %p71 = scmp.eq.s32.totalorder %s23, 5
      %p72 = por %p70, %p71
      %p74 = scmp.ne.s32.totalorder %s57, %s73
      %p75 = scmp.eq.s32.totalorder %s23, 0
      %p76 = por %p74, %p75
      %s77 = ssub.s32 %s17, %s24
      %p78 = scmp.eq.s32.totalorder %s77, 0
      %s80 = sadd.s32 %s79, 1
      %s81 = scalar_select %p78, %s79, %s80
      %p84 = pneg %p78
      %p85 = scmp.eq.s32.totalorder %s17, 5
      %p86 = por %p84, %p85
      %p87 = scmp.ne.s32.totalorder %s79, %s82
      %p88 = scmp.eq.s32.totalorder %s17, 0
      %p89 = por %p87, %p88
      %p90 = scmp.ne.s32.totalorder %s79, %s82
      %p91 = scmp.eq.s32.totalorder %s22, 5
      %p92 = por %p90, %p91
      %p93 = scmp.ne.s32.totalorder %s82, %s83
      %p94 = scmp.eq.s32.totalorder %s22, 0
      %p95 = por %p93, %p94
      %p96 = scmp.ne.s32.totalorder %s82, %s83
      %p97 = scmp.eq.s32.totalorder %s23, 5
      %p98 = por %p96, %p97
      %p100 = scmp.ne.s32.totalorder %s83, %s99
      %p101 = scmp.eq.s32.totalorder %s23, 0
      %p102 = por %p100, %p101
      %p103 = scmp.le.s32.totalorder 1, %s17
      %p104 = scmp.lt.s32.totalorder %s17, 7
      %p105 = pnand %p103, %p104
      %p106 = pneg %p105
      // Predicated region
      $region9: #{tpu_custom_call.1} parent=5 // pred_check
        _
      $region10: #{tpu_custom_call.1} parent=5 // pred_check_branch
        %108 = sbr.rel (%p105) target = $region12
      $region11: #{tpu_custom_call.1} parent=5 // pred_region
        %s109 = ssub.s32 %s17, 1
      $region12: #{tpu_custom_call.1} parent=5 // pred_fallthru
        _
      %p110 = scmp.lt.s32.totalorder %s17, 6
      // Predicated region
      $region13: #{tpu_custom_call.1} parent=5 // pred_check
        %p111 = pneg %p110
      $region14: #{tpu_custom_call.1} parent=5 // pred_check_branch
        %113 = sbr.rel (%p111) target = $region16
      $region15: #{tpu_custom_call.1} parent=5 // pred_region
        // Predicated region
        $region17: #{tpu_custom_call.1} parent=15 // pred_check
          %p114 = pneg %p37
        $region18: #{tpu_custom_call.1} parent=15 // pred_check_branch
          %116 = sbr.rel (%p114) target = $region20
        $region19: #{tpu_custom_call.1} parent=15 // pred_region
          %s117 = sand.u32 %s27, 1
          %s118 = scalar_lea.sflag [#allocation3], %s117
          %s119 = sand.u32 %s27, 1
          %s120 = smul.addr %s119, 128
          %s121 = scalar_lea.vmem [#allocation2], %s120
          %s122 = smul.u32 16, %s17
          %s123 = ssub.s32 94, %s122
          %p124 = scmp.lt.s32.totalorder %s123, 16
          %s125 = scalar_select %p124, %s123, 16
          %s126 = smul.u32 128, %s125
          %s128 = ssub.s32 2048, %s126
          %129 = vsyncadd %s118, %s128
          %p130 = scmp.ne.s32.totalorder 0, %s126
          %s131 = smul.addr %s122, 128
          %s132 = scalar_lea.hbm %s0, %s131
          %s133 = smul.u32 8, %s125
          %s134 = sshll.u32 %s121, 4
          %s135 = int_to_ptr.vmem [resolvable:$true] %s134
          %s136 = sshll.u32 %s133, 4
          %140 = dma.hbm_to_vmem [thread:$0]  (%p130), %s132, %s136, %s135, %s118, 128, 128, 8
        $region20: #{tpu_custom_call.1} parent=15 // pred_fallthru
          _
        // Predicated region
        $region21: #{tpu_custom_call.1} parent=15 // pred_check
          %p141 = pneg %p63
        $region22: #{tpu_custom_call.1} parent=15 // pred_check_branch
          %143 = sbr.rel (%p141) target = $region24
        $region23: #{tpu_custom_call.1} parent=15 // pred_region
          %s144 = sand.u32 %s53, 1
          %s145 = scalar_lea.sflag [#allocation6], %s144
          %s146 = sand.u32 %s53, 1
          %s147 = smul.addr %s146, 128
          %s148 = scalar_lea.vmem [#allocation5], %s147
          %s149 = smul.u32 16, %s17
          %s150 = ssub.s32 94, %s149
          %p151 = scmp.lt.s32.totalorder %s150, 16
          %s152 = scalar_select %p151, %s150, 16
          %s153 = smul.u32 128, %s152
          %s155 = ssub.s32 2048, %s153
          %156 = vsyncadd %s145, %s155
          %p157 = scmp.ne.s32.totalorder 0, %s153
          %s158 = smul.addr %s149, 128
          %s159 = scalar_lea.hbm %s1, %s158
          %s160 = smul.u32 8, %s152
          %s161 = sshll.u32 %s148, 4
          %s162 = int_to_ptr.vmem [resolvable:$true] %s161
          %s163 = sshll.u32 %s160, 4
          %167 = dma.hbm_to_vmem [thread:$0]  (%p157), %s159, %s163, %s162, %s145, 128, 128, 8
        $region24: #{tpu_custom_call.1} parent=15 // pred_fallthru
          _
      $region16: #{tpu_custom_call.1} parent=5 // pred_fallthru
        _
      %p168 = scmp.le.s32.totalorder 1, %s17
      %p169 = scmp.lt.s32.totalorder %s17, 7
      %p170 = pnand %p168, %p169
      %p171 = pneg %p170
      // Predicated region
      $region25: #{tpu_custom_call.1} parent=5 // pred_check
        _
      $region26: #{tpu_custom_call.1} parent=5 // pred_check_branch
        %173 = sbr.rel (%p170) target = $region28
      $region27: #{tpu_custom_call.1} parent=5 // pred_region
        %s174 = ssub.s32 %s17, 1
        %s175 = sand.u32 %s30, 1
        %s176 = scalar_lea.sflag [#allocation3], %s175
        %s177 = sand.u32 %s30, 1
        %s178 = smul.addr %s177, 128
        %s179 = scalar_lea.vmem [#allocation2], %s178
        // Predicated region
        $region29: #{tpu_custom_call.1} parent=27 // pred_check
          %p180 = pneg %p43
        $region30: #{tpu_custom_call.1} parent=27 // pred_check_branch
          %182 = sbr.rel (%p180) target = $region32
        $region31: #{tpu_custom_call.1} parent=27 // pred_region
          %183 = dma.done %s176, 2048
        $region32: #{tpu_custom_call.1} parent=27 // pred_fallthru
          _
        %s184 = sand.u32 %s56, 1
        %s185 = scalar_lea.sflag [#allocation6], %s184
        %s186 = sand.u32 %s56, 1
        %s187 = smul.addr %s186, 128
        %s188 = scalar_lea.vmem [#allocation5], %s187
        // Predicated region
        $region33: #{tpu_custom_call.1} parent=27 // pred_check
          %p189 = pneg %p69
        $region34: #{tpu_custom_call.1} parent=27 // pred_check_branch
          %191 = sbr.rel (%p189) target = $region36
        $region35: #{tpu_custom_call.1} parent=27 // pred_region
          %192 = dma.done %s185, 2048
        $region36: #{tpu_custom_call.1} parent=27 // pred_fallthru
          _
        %s193 = sand.u32 %s30, 1
        %s194 = scalar_lea.sflag [#allocation3], %s193
        %s195 = sand.u32 %s30, 1
        %s196 = smul.addr %s195, 128
        %s197 = scalar_lea.vmem [#allocation2], %s196
        %p198 = pneg %p43
        %p199 = pneg %p40
        %s200 = sand.u32 %s56, 1
        %s201 = scalar_lea.sflag [#allocation6], %s200
        %s202 = sand.u32 %s56, 1
        %s203 = smul.addr %s202, 128
        %s204 = scalar_lea.vmem [#allocation5], %s203
        %p205 = pneg %p69
        %p206 = pneg %p66
        %p207 = pneg %p95
        %p208 = pneg %p92
        %s209 = sand.u32 %s82, 1
        %s210 = scalar_lea.sflag [#allocation4], %s209
        %s211 = sand.u32 %s82, 1
        %s212 = smul.addr %s211, 8
        %s213 = scalar_lea.vmem [#allocation7], %s212
        %s214 = smul.u32 16, %s22
        %s215 = ssub.s32 94, %s214
        %p216 = scmp.lt.s32.totalorder %s215, 16
        %s217 = scalar_select %p216, %s215, 16
        %s218 = smul.u32 128, %s217
        %s219 = smul.u32 16, %s22
        %s220 = ssub.s32 94, %s219
        %p221 = scmp.lt.s32.totalorder %s220, 16
        %s222 = scalar_select %p221, %s220, 16
        %s223 = smul.u32 128, %s222
        %s224 = smul.u32 %s22, 128
        %v225 = vld [vmem:[%s179] sm:$0xff]
        %v226 = vld [vmem:[%s179 + $0x8] sm:$0xff]
        %v227 = vld [vmem:[%s179 + $0x10] sm:$0xff]
        %v228 = vld [vmem:[%s179 + $0x18] sm:$0xff]
        %v229 = vld [vmem:[%s179 + $0x20] sm:$0xff]
        %v230 = vld [vmem:[%s179 + $0x28] sm:$0xff]
        %v231 = vld [vmem:[%s179 + $0x30] sm:$0xff]
        %v232 = vld [vmem:[%s179 + $0x38] sm:$0xff]
        %v233 = vld [vmem:[%s188] sm:$0xff]
        %v234 = vld [vmem:[%s188 + $0x8] sm:$0xff]
        %v235 = vld [vmem:[%s188 + $0x10] sm:$0xff]
        %v236 = vld [vmem:[%s188 + $0x18] sm:$0xff]
        %v237 = vld [vmem:[%s188 + $0x20] sm:$0xff]
        %v238 = vld [vmem:[%s188 + $0x28] sm:$0xff]
        %v239 = vld [vmem:[%s188 + $0x30] sm:$0xff]
        %v240 = vld [vmem:[%s188 + $0x38] sm:$0xff]
        %v241 = vsub.f32 0.0, %v225
        %v242 = vsub.f32 0.0, %v226
        %v243 = vsub.f32 0.0, %v227
        %v244 = vsub.f32 0.0, %v228
        %v245 = vsub.f32 0.0, %v229
        %v246 = vsub.f32 0.0, %v230
        %v247 = vsub.f32 0.0, %v231
        %v248 = vsub.f32 0.0, %v232
        %v249 = vmul.f32 %v241, %v233
        %v250 = vmul.f32 %v242, %v234
        %v251 = vmul.f32 %v243, %v235
        %v252 = vmul.f32 %v244, %v236
        %v253 = vmul.f32 %v245, %v237
        %v254 = vmul.f32 %v246, %v238
        %v255 = vmul.f32 %v247, %v239
        %v256 = vmul.f32 %v248, %v240
        %v257 = vlaneseq
        %v258 = vshrl.u32 %v257, 7
        %v259 = vadd.s32 %v258, 8
        %v260 = vadd.s32 %v258, 16
        %v261 = vadd.s32 %v258, 24
        %v262 = vadd.s32 %v258, 32
        %v263 = vadd.s32 %v258, 40
        %v264 = vadd.s32 %v258, 48
        %v265 = vadd.s32 %v258, 56
        %s266 = sadd.s32 %s224, 0
        %v267 = vstv %s266
        %v268 = vadd.s32 %v258, %v267
        %v269 = vadd.s32 %v259, %v267
        %v270 = vadd.s32 %v260, %v267
        %v271 = vadd.s32 %v261, %v267
        %v272 = vadd.s32 %v262, %v267
        %v273 = vadd.s32 %v263, %v267
        %v274 = vadd.s32 %v264, %v267
        %v275 = vadd.s32 %v265, %v267
        %vm276 = vcmp.lt.s32.totalorder %v268, 750
        %vm277 = vcmp.lt.s32.totalorder %v269, 750
        %vm278 = vcmp.lt.s32.totalorder %v270, 750
        %vm279 = vcmp.lt.s32.totalorder %v271, 750
        %vm280 = vcmp.lt.s32.totalorder %v272, 750
        %vm281 = vcmp.lt.s32.totalorder %v273, 750
        %vm282 = vcmp.lt.s32.totalorder %v274, 750
        %vm283 = vcmp.lt.s32.totalorder %v275, 750
        %v284 = vsel %vm276, %v249, -10000.0
        %v285 = vsel %vm277, %v250, -10000.0
        %v286 = vsel %vm278, %v251, -10000.0
        %v287 = vsel %vm279, %v252, -10000.0
        %v288 = vsel %vm280, %v253, -10000.0
        %v289 = vsel %vm281, %v254, -10000.0
        %v290 = vsel %vm282, %v255, -10000.0
        %v291 = vsel %vm283, %v256, -10000.0
        %v292 = vmul.f32 %v284, 1.442695
        %v293 = vpow.pop %v292
        %v294 = vmul.f32 %v285, 1.442695
        %v295 = vpow.pop %v294
        %v296 = vmul.f32 %v286, 1.442695
        %v297 = vpow.pop %v296
        %v298 = vmul.f32 %v287, 1.442695
        %v299 = vpow.pop %v298
        %v300 = vmul.f32 %v288, 1.442695
        %v301 = vpow.pop %v300
        %v302 = vmul.f32 %v289, 1.442695
        %v303 = vpow.pop %v302
        %v304 = vmul.f32 %v290, 1.442695
        %v305 = vpow.pop %v304
        %v306 = vmul.f32 %v291, 1.442695
        %v307 = vpow.pop %v306
        %v308 = vadd.f32 %v293, 1.0
        %v309 = vadd.f32 %v295, 1.0
        %v310 = vadd.f32 %v297, 1.0
        %v311 = vadd.f32 %v299, 1.0
        %v312 = vadd.f32 %v301, 1.0
        %v313 = vadd.f32 %v303, 1.0
        %v314 = vadd.f32 %v305, 1.0
        %v315 = vadd.f32 %v307, 1.0
        %v316 = vlog2.pop %v308
        %v317 = vmul.f32 %v316, 0.6931472
        %v318 = vlog2.pop %v309
        %v319 = vmul.f32 %v318, 0.6931472
        %v320 = vlog2.pop %v310
        %v321 = vmul.f32 %v320, 0.6931472
        %v322 = vlog2.pop %v311
        %v323 = vmul.f32 %v322, 0.6931472
        %v324 = vlog2.pop %v312
        %v325 = vmul.f32 %v324, 0.6931472
        %v326 = vlog2.pop %v313
        %v327 = vmul.f32 %v326, 0.6931472
        %v328 = vlog2.pop %v314
        %v329 = vmul.f32 %v328, 0.6931472
        %v330 = vlog2.pop %v315
        %v331 = vmul.f32 %v330, 0.6931472
        %v332 = vadd.f32 %v317, %v319
        %v333 = vadd.f32 %v332, %v321
        %v334 = vadd.f32 %v333, %v323
        %v335 = vadd.f32 %v334, %v325
        %v336 = vadd.f32 %v335, %v327
        %v337 = vadd.f32 %v336, %v329
        %v338 = vadd.f32 %v337, %v331
        %v339 = vadd.f32 %v338, 0.0
        %s340 = scalar_lea.vmem %s179, 64 [#allocation2]
        %v341 = vld [vmem:[%s340] sm:$0xff]
        %v342 = vld [vmem:[%s340 + $0x8] sm:$0xff]
        %v343 = vld [vmem:[%s340 + $0x10] sm:$0xff]
        %v344 = vld [vmem:[%s340 + $0x18] sm:$0xff]
        %v345 = vld [vmem:[%s340 + $0x20] sm:$0xff]
        %v346 = vld [vmem:[%s340 + $0x28] sm:$0xff]
        %v347 = vld [vmem:[%s340 + $0x30] sm:$0xff]
        %v348 = vld [vmem:[%s340 + $0x38] sm:$0xff]
        %s349 = scalar_lea.vmem %s188, 64 [#allocation5]
        %v350 = vld [vmem:[%s349] sm:$0xff]
        %v351 = vld [vmem:[%s349 + $0x8] sm:$0xff]
        %v352 = vld [vmem:[%s349 + $0x10] sm:$0xff]
        %v353 = vld [vmem:[%s349 + $0x18] sm:$0xff]
        %v354 = vld [vmem:[%s349 + $0x20] sm:$0xff]
        %v355 = vld [vmem:[%s349 + $0x28] sm:$0xff]
        %v356 = vld [vmem:[%s349 + $0x30] sm:$0xff]
        %v357 = vld [vmem:[%s349 + $0x38] sm:$0xff]
        %v358 = vsub.f32 0.0, %v341
        %v359 = vsub.f32 0.0, %v342
        %v360 = vsub.f32 0.0, %v343
        %v361 = vsub.f32 0.0, %v344
        %v362 = vsub.f32 0.0, %v345
        %v363 = vsub.f32 0.0, %v346
        %v364 = vsub.f32 0.0, %v347
        %v365 = vsub.f32 0.0, %v348
        %v366 = vmul.f32 %v358, %v350
        %v367 = vmul.f32 %v359, %v351
        %v368 = vmul.f32 %v360, %v352
        %v369 = vmul.f32 %v361, %v353
        %v370 = vmul.f32 %v362, %v354
        %v371 = vmul.f32 %v363, %v355
        %v372 = vmul.f32 %v364, %v356
        %v373 = vmul.f32 %v365, %v357
        %s374 = sadd.s32 %s224, 64
        %v375 = vstv %s374
        %v376 = vadd.s32 %v258, %v375
        %v377 = vadd.s32 %v259, %v375
        %v378 = vadd.s32 %v260, %v375
        %v379 = vadd.s32 %v261, %v375
        %v380 = vadd.s32 %v262, %v375
        %v381 = vadd.s32 %v263, %v375
        %v382 = vadd.s32 %v264, %v375
        %v383 = vadd.s32 %v265, %v375
        %vm384 = vcmp.lt.s32.totalorder %v376, 750
        %vm385 = vcmp.lt.s32.totalorder %v377, 750
        %vm386 = vcmp.lt.s32.totalorder %v378, 750
        %vm387 = vcmp.lt.s32.totalorder %v379, 750
        %vm388 = vcmp.lt.s32.totalorder %v380, 750
        %vm389 = vcmp.lt.s32.totalorder %v381, 750
        %vm390 = vcmp.lt.s32.totalorder %v382, 750
        %vm391 = vcmp.lt.s32.totalorder %v383, 750
        %v392 = vsel %vm384, %v366, -10000.0
        %v393 = vsel %vm385, %v367, -10000.0
        %v394 = vsel %vm386, %v368, -10000.0
        %v395 = vsel %vm387, %v369, -10000.0
        %v396 = vsel %vm388, %v370, -10000.0
        %v397 = vsel %vm389, %v371, -10000.0
        %v398 = vsel %vm390, %v372, -10000.0
        %v399 = vsel %vm391, %v373, -10000.0
        %v400 = vmul.f32 %v392, 1.442695
        %v401 = vpow.pop %v400
        %v402 = vmul.f32 %v393, 1.442695
        %v403 = vpow.pop %v402
        %v404 = vmul.f32 %v394, 1.442695
        %v405 = vpow.pop %v404
        %v406 = vmul.f32 %v395, 1.442695
        %v407 = vpow.pop %v406
        %v408 = vmul.f32 %v396, 1.442695
        %v409 = vpow.pop %v408
        %v410 = vmul.f32 %v397, 1.442695
        %v411 = vpow.pop %v410
        %v412 = vmul.f32 %v398, 1.442695
        %v413 = vpow.pop %v412
        %v414 = vmul.f32 %v399, 1.442695
        %v415 = vpow.pop %v414
        %v416 = vadd.f32 %v401, 1.0
        %v417 = vadd.f32 %v403, 1.0
        %v418 = vadd.f32 %v405, 1.0
        %v419 = vadd.f32 %v407, 1.0
        %v420 = vadd.f32 %v409, 1.0
        %v421 = vadd.f32 %v411, 1.0
        %v422 = vadd.f32 %v413, 1.0
        %v423 = vadd.f32 %v415, 1.0
        %v424 = vlog2.pop %v416
        %v425 = vmul.f32 %v424, 0.6931472
        %v426 = vlog2.pop %v417
        %v427 = vmul.f32 %v426, 0.6931472
        %v428 = vlog2.pop %v418
        %v429 = vmul.f32 %v428, 0.6931472
        %v430 = vlog2.pop %v419
        %v431 = vmul.f32 %v430, 0.6931472
        %v432 = vlog2.pop %v420
        %v433 = vmul.f32 %v432, 0.6931472
        %v434 = vlog2.pop %v421
        %v435 = vmul.f32 %v434, 0.6931472
        %v436 = vlog2.pop %v422
        %v437 = vmul.f32 %v436, 0.6931472
        %v438 = vlog2.pop %v423
        %v439 = vmul.f32 %v438, 0.6931472
        %v440 = vadd.f32 %v425, %v427
        %v441 = vadd.f32 %v440, %v429
        %v442 = vadd.f32 %v441, %v431
        %v443 = vadd.f32 %v442, %v433
        %v444 = vadd.f32 %v443, %v435
        %v445 = vadd.f32 %v444, %v437
        %v446 = vadd.f32 %v445, %v439
        %v447 = vadd.f32 %v339, %v446
        %448 = vst [vmem:[%s213] sm:$0xff] %v447
        %s449 = sand.u32 %s82, 1
        %s450 = scalar_lea.sflag [#allocation4], %s449
        %s451 = sand.u32 %s82, 1
        %s452 = smul.addr %s451, 8
        %s453 = scalar_lea.vmem [#allocation7], %s452
        // Predicated region
        $region37: #{tpu_custom_call.1} parent=27 // pred_check
          %p454 = pneg %p92
        $region38: #{tpu_custom_call.1} parent=27 // pred_check_branch
          %456 = sbr.rel (%p454) target = $region40
        $region39: #{tpu_custom_call.1} parent=27 // pred_region
          %s458 = ssub.s32 128, 128
          %459 = vsyncadd %s450, %s458
          %s460 = smul.addr %s22, 128
          %s461 = scalar_lea.hbm %s2, %s460
          %s463 = sshll.u32 %s453, 4
          %s464 = int_to_ptr.vmem [resolvable:$true] %s463
          %466 = dma.vmem_to_hbm [thread:$0]  %s464, 128, %s461, %s450
        $region40: #{tpu_custom_call.1} parent=27 // pred_fallthru
          _
      $region28: #{tpu_custom_call.1} parent=5 // pred_fallthru
        _
      %p467 = scmp.le.s32.totalorder 2, %s17
      // Predicated region
      $region41: #{tpu_custom_call.1} parent=5 // pred_check
        %p468 = pneg %p467
      $region42: #{tpu_custom_call.1} parent=5 // pred_check_branch
        %470 = sbr.rel (%p468) target = $region44
      $region43: #{tpu_custom_call.1} parent=5 // pred_region
        %s471 = ssub.s32 %s17, 2
        // Predicated region
        $region45: #{tpu_custom_call.1} parent=43 // pred_check
          %p472 = pneg %p98
        $region46: #{tpu_custom_call.1} parent=43 // pred_check_branch
          %474 = sbr.rel (%p472) target = $region48
        $region47: #{tpu_custom_call.1} parent=43 // pred_region
          %s475 = sand.u32 %s83, 1
          %s476 = scalar_lea.sflag [#allocation4], %s475
          %s477 = sand.u32 %s83, 1
          %s478 = smul.addr %s477, 8
          %s479 = scalar_lea.vmem [#allocation7], %s478
          %480 = dma.done %s476, 128
        $region48: #{tpu_custom_call.1} parent=43 // pred_fallthru
          _
      $region44: #{tpu_custom_call.1} parent=5 // pred_fallthru
        _
    $region6: #{tpu_custom_call.1} parent=1 // loop_footer
      %s21 = sadd.s32 1, %s17
    $region7: #{tpu_custom_call.1} parent=1 // loop_footer_branch
      %16 = sbr.rel target = $region3
    $region8: #{tpu_custom_call.1} parent=1 // loop_exit
      _
    %481 = vsyncpa [#allocation3], 1
    %s482 = scalar_lea.sflag [#allocation3], 1
    %483 = vsyncpa %s482, 1
    %484 = vsyncpa [#allocation6], 1
    %s485 = scalar_lea.sflag [#allocation6], 1
    %486 = vsyncpa %s485, 1
    %487 = vsyncpa [#allocation4], 1
    %s488 = scalar_lea.sflag [#allocation4], 1
    %489 = vsyncpa %s488, 1

</llo_original>
